<compile_context>
chip_gen: v6e
topology: v6e:2x2x1
jax: 0.10.0
libtpu: 0.0.40
codegen_flags: <defaults>
</compile_context>

<pallas_src>
import functools

import jax
import jax.numpy as jnp
from jax.experimental import pallas as pl
from jax.experimental.pallas import tpu as pltpu


def _round_up(x, m):
    return (x + m - 1) // m * m


def _disc_kernel(h_ref, c_ref, c_tail_ref, w_ref, b_ref, out_ref, *, negsamp_round):
    # h_ref, c_ref : [TM, H]   bf16 tiles (double-buffered by BlockSpec)
    # c_tail_ref   : [RB, H]   bf16 tail of the *previous* (wrap-around) tile
    # w_ref        : [H, H]    bf16, resident across the grid
    # b_ref        : [1]       f32 scalar in SMEM
    # out_ref      : [R+1, TM] f32, lane-dense output block
    f32 = jnp.float32
    tm, hdim = h_ref.shape
    rb = c_tail_ref.shape[0]
    bias = b_ref[0]

    # Shared MXU matmul (bf16 x bf16 -> f32 accumulate):
    #   t[n, j] = sum_i h[n, i] * W[i, j]
    t = jnp.dot(h_ref[...], w_ref[...], preferred_element_type=f32)   # [TM, H]
    c_cur = c_ref[...].astype(f32)                                    # [TM, H]

    # Positive score.
    out_ref[0, :] = jnp.sum(t * c_cur, axis=-1) + bias

    if negsamp_round > 0:
        row_idx = jax.lax.broadcasted_iota(jnp.int32, (tm, hdim), 0)
        c_tail = c_tail_ref[...].astype(f32)                          # [RB, H]

        # Negative rounds: c rolled forward by r rows (global roll).  Rows
        # n >= r come from this tile (in-tile roll); rows n < r come from the
        # last r rows of the previous tile (the tiny tail block).
        for r in range(1, negsamp_round + 1):
            rolled = pltpu.roll(c_cur, shift=r, axis=0)               # [TM, H]
            for k in range(r):                                        # seam fix
                fix_row = c_tail[rb - r + k:rb - r + k + 1, :]        # [1, H]
                rolled = jnp.where(row_idx == k, fix_row, rolled)
            out_ref[r, :] = jnp.sum(t * rolled, axis=-1) + bias


def discriminator_forward(c, h_pl, weight, bias, negsamp_round=1, tile_rows=1024):
    """c, h_pl: [N, n_h]; weight: [n_h, n_h]; bias: [1]  ->  [(R+1)*N, 1]."""
    N, n_h = c.shape
    R = int(negsamp_round)
    assert 0 <= R <= N, "negsamp_round must satisfy 0 <= negsamp_round <= N"

    bf16, f32 = jnp.bfloat16, jnp.float32
    H = _round_up(n_h, 128)                       # lane-pad hidden dim
    TM = min(_round_up(tile_rows, 128), _round_up(N, 128))  # row tile
    RB = max(8, pl.next_power_of_2(max(R, 1)))    # wrap-tail rows (sublane blk)
    assert R <= RB and TM % RB == 0
    N_pad = _round_up(N, TM)
    # Row padding must be either zero or >= R so that the wrap rows written at
    # the tail of the padded array never clobber real rows.
    if N_pad != N and (N_pad - N) < R:
        N_pad += TM
    num_tiles = N_pad // TM

    # bf16 cast (halves kernel HBM read traffic; products are exact, matmul
    # accumulates in f32).  Zero padding is fused into the same single pass
    # and is skipped entirely when shapes are already aligned.
    h_b = h_pl.astype(bf16)
    c_b = c.astype(bf16)
    w_b = weight.astype(bf16)
    if N_pad != N or H != n_h:
        h_p = jnp.zeros((N_pad, H), bf16).at[:N, :n_h].set(h_b)
        c_p = jnp.zeros((N_pad, H), bf16).at[:N, :n_h].set(c_b)
        if R > 0 and N_pad != N:
            # Last R *real* rows of c also live at the very end of the padded
            # array so the tile-0 wrap-around tail block reads real data.
            c_p = c_p.at[N_pad - R:, :n_h].set(c_b[N - R:, :])
    else:
        h_p, c_p = h_b, c_b
    w_p = w_b if H == n_h else jnp.zeros((H, H), bf16).at[:n_h, :n_h].set(w_b)
    b = bias.astype(f32).reshape((1,))

    # Index map for the tiny wrap tail: the RB rows immediately preceding this
    # tile (mod N_pad), expressed in RB-row block units.
    tiles_per_blk = TM // RB
    n_tail_blocks = N_pad // RB

    def tail_index_map(i):
        return ((i * tiles_per_blk + n_tail_blocks - 1) % n_tail_blocks, 0)

    # Per-step VMEM footprint (double-buffered inputs/outputs + resident W);
    # cap at 48 MiB so it is safe on v7x's 64 MiB physical VMEM as well.
    step_bytes = (
        2 * 2 * (TM * H * 2)          # h + c tiles, x2 buffers, bf16
        + 2 * (RB * H * 2)            # wrap tail, x2 buffers
        + 2 * (H * H * 2)             # W (2 buffers by default)
        + 2 * ((R + 1) * TM * 4)      # output block, x2 buffers, f32
    )
    vmem_limit = int(min(48 * 1024 * 1024, max(32 * 1024 * 1024, 2 * step_bytes)))

    out = pl.pallas_call(
        functools.partial(_disc_kernel, negsamp_round=R),
        out_shape=jax.ShapeDtypeStruct((R + 1, N_pad), f32),
        grid=(num_tiles,),
        in_specs=[
            pl.BlockSpec((TM, H), lambda i: (i, 0)),                  # h tile
            pl.BlockSpec((TM, H), lambda i: (i, 0)),                  # c tile
            pl.BlockSpec((RB, H), tail_index_map),                    # wrap tail
            pl.BlockSpec((H, H), lambda i: (0, 0)),                   # W resident
            pl.BlockSpec(memory_space=pltpu.MemorySpace.SMEM),        # bias
        ],
        out_specs=pl.BlockSpec((R + 1, TM), lambda i: (0, i)),
        compiler_params=pltpu.CompilerParams(
            dimension_semantics=("parallel",),
            vmem_limit_bytes=vmem_limit,
        ),
    )(h_p, c_p, c_p, w_p, b)

    # Drop row padding; torch.cat of per-round (N, 1) blocks -> [(R+1)*N, 1].
    return out[:, :N].reshape((R + 1) * N, 1)


def _reference_forward(c, h_pl, weight, bias, negsamp_round=1):
    # Pure-JAX reference mirroring the PyTorch Discriminator exactly.
    def f_k(x1, x2):
        return jnp.einsum(
            "ni,ij,nj->n", x1, weight, x2, precision="highest"
        )[:, None] + bias[0]

    scs = [f_k(h_pl, c)]
    c_mi = c
    for _ in range(negsamp_round):
        c_mi = jnp.concatenate([c_mi[-1:, :], c_mi[:-1, :]], axis=0)
        scs.append(f_k(h_pl, c_mi))
    return jnp.concatenate(scs, axis=0)


def _make_inputs(key, n, n_h):
    k_c, k_h, k_w = jax.random.split(key, 3)
    c = jax.random.normal(k_c, (n, n_h), dtype=jnp.float32)
    h_pl = jax.random.normal(k_h, (n, n_h), dtype=jnp.float32)
    # Xavier-uniform init for the (1, n_h, n_h) Bilinear weight; bias = 0.
    fan_in = n_h * n_h
    fan_out = 1 * n_h
    bound = (6.0 / (fan_in + fan_out)) ** 0.5
    weight = jax.random.uniform(
        k_w, (n_h, n_h), dtype=jnp.float32, minval=-bound, maxval=bound
    )
    bias = jnp.zeros((1,), dtype=jnp.float32)
    return c, h_pl, weight, bias


def _check(c, h, w, b, negsamp_round, tile_rows, name):
    logits = jax.block_until_ready(
        discriminator_forward(
            c, h, w, b, negsamp_round=negsamp_round, tile_rows=tile_rows
        )
    )
    # The kernel runs its inputs through bf16 (f32 accumulation), so compare
    # against the f32 reference evaluated on bf16-rounded inputs.
    cq = c.astype(jnp.bfloat16).astype(jnp.float32)
    hq = h.astype(jnp.bfloat16).astype(jnp.float32)
    wq = w.astype(jnp.bfloat16).astype(jnp.float32)
    ref = _reference_forward(cq, hq, wq, b, negsamp_round=negsamp_round)
    expect_shape = ((negsamp_round + 1) * c.shape[0], 1)
    assert logits.shape == expect_shape, (name, logits.shape, expect_shape)
    err = float(jnp.max(jnp.abs(logits - ref)))
    assert jnp.allclose(logits, ref, atol=2e-3, rtol=2e-3), (name, err)


if __name__ == "__main__":
    key = jax.random.PRNGKey(0)
    k1, k2, k3 = jax.random.split(key, 3)

    # --- Test 1: module-default small shapes (single tile, padded N / n_h) ---
    c, h_pl, weight, bias = _make_inputs(k1, 8, 32)
    _check(c, h_pl, weight, bias, negsamp_round=1, tile_rows=1024, name="small")

    # --- Test 2: multi-tile grid, wrap across tile seams, R=2, ragged rows ---
    c2, h2, w2, b2 = _make_inputs(k2, 600, 48)
    _check(c2, h2, w2, b2, negsamp_round=2, tile_rows=256, name="multi_tile")

    # --- Test 3: no-padding fast path (n_h % 128 == 0, N % TM == 0) ---
    c3, h3, w3, b3 = _make_inputs(k3, 256, 128)
    _check(c3, h3, w3, b3, negsamp_round=1, tile_rows=128, name="no_pad")

    print("KERNEL_OK")
</pallas_src>

<mosaic_0001>
module attributes {stable_mosaic.version = 11 : i64} {
  func.func @_disc_kernel(%arg0: i32, %arg1: memref<128x128xbf16, #tpu.memory_space<vmem>>, %arg2: memref<128x128xbf16, #tpu.memory_space<vmem>>, %arg3: memref<8x128xbf16, #tpu.memory_space<vmem>>, %arg4: memref<128x128xbf16, #tpu.memory_space<vmem>>, %arg5: memref<1xf32, #tpu.memory_space<smem>>, %arg6: memref<2x128xf32, #tpu.memory_space<vmem>>) attributes {dimension_semantics = [#tpu.dimension_semantics<parallel>], iteration_bounds = array<i64: 1>, scalar_prefetch = 0 : i64, scratch_operands = 0 : i64, tpu.core_type = #tpu.core_type<tc>, window_params = [{transform_indices = @transform_0, window_bounds = array<i64: 128, 128>}, {transform_indices = @transform_1, window_bounds = array<i64: 128, 128>}, {transform_indices = @transform_2, window_bounds = array<i64: 8, 128>}, {pipeline_mode = #tpu.pipeline_mode<synchronous>, transform_indices = @transform_3, window_bounds = array<i64: 128, 128>}, {transform_indices = @transform_4, window_bounds = array<i64: 1>}, {transform_indices = @transform_5, window_bounds = array<i64: 2, 128>}]} {
    %c0 = arith.constant 0 : index
    %0 = memref.load %arg5[%c0] : memref<1xf32, #tpu.memory_space<smem>>
    %c0_0 = arith.constant 0 : index
    %c0_1 = arith.constant 0 : index
    %1 = vector.load %arg1[%c0_0, %c0_1] : memref<128x128xbf16, #tpu.memory_space<vmem>>, vector<128x128xbf16>
    %c0_2 = arith.constant 0 : index
    %c0_3 = arith.constant 0 : index
    %2 = vector.load %arg4[%c0_2, %c0_3] : memref<128x128xbf16, #tpu.memory_space<vmem>>, vector<128x128xbf16>
    %cst = arith.constant dense<0.000000e+00> : vector<128x128xf32>
    %3 = tpu.matmul %1, %2, %cst {dimension_numbers = #tpu.dot_dimension_numbers<[1], [0], [0], [1], [0, 0, 1, 1], [], []>} : vector<128x128xbf16>, vector<128x128xbf16>, vector<128x128xf32> -> vector<128x128xf32>
    %c0_4 = arith.constant 0 : index
    %c0_5 = arith.constant 0 : index
    %4 = vector.load %arg2[%c0_4, %c0_5] : memref<128x128xbf16, #tpu.memory_space<vmem>>, vector<128x128xbf16>
    %5 = arith.extf %4 : vector<128x128xbf16> to vector<128x128xf32>
    %6 = arith.mulf %3, %5 : vector<128x128xf32>
    %cst_6 = arith.constant dense<0.000000e+00> : vector<128xf32>
    %7 = vector.multi_reduction <add>, %6, %cst_6 [1] : vector<128x128xf32> to vector<128xf32>
    %8 = vector.broadcast %0 : f32 to vector<128xf32>
    %9 = arith.addf %7, %8 : vector<128xf32>
    %c0_7 = arith.constant 0 : index
    %c0_8 = arith.constant 0 : index
    %10 = vector.load %arg6[%c0_7, %c0_8] : memref<2x128xf32, #tpu.memory_space<vmem>>, vector<1x128xf32>
    %11 = vector.shape_cast %10 : vector<1x128xf32> to vector<128xf32>
    %12 = vector.shape_cast %9 : vector<128xf32> to vector<1x128xf32>
    tpu.vector_store %arg6[%c0_7, %c0_8], %12 {strides = array<i32>} : memref<2x128xf32, #tpu.memory_space<vmem>>, vector<1x128xf32>,
    %13 = tpu.iota {dimensions = array<i32: 0>} : vector<128x128xi32>
    %c0_9 = arith.constant 0 : index
    %c0_10 = arith.constant 0 : index
    %14 = vector.load %arg3[%c0_9, %c0_10] : memref<8x128xbf16, #tpu.memory_space<vmem>>, vector<8x128xbf16>
    %15 = arith.extf %14 : vector<8x128xbf16> to vector<8x128xf32>
    %c1_i32 = arith.constant 1 : i32
    %16 = tpu.dynamic_rotate %5 by %c1_i32 dim 0 : vector<128x128xf32>, i32 -> vector<128x128xf32>
    %17 = vector.extract_strided_slice %15 {offsets = [7, 0], sizes = [1, 128], strides = [1, 1]} : vector<8x128xf32> to vector<1x128xf32>
    %c0_i32 = arith.constant 0 : i32
    %18 = vector.broadcast %c0_i32 : i32 to vector<128x128xi32>
    %19 = arith.cmpi eq, %13, %18 : vector<128x128xi32>
    %20 = vector.shape_cast %17 : vector<1x128xf32> to vector<1x128xf32>
    %21 = vector.broadcast %20 : vector<1x128xf32> to vector<128x128xf32>
    %22 = arith.select %19, %21, %16 : vector<128x128xi1>, vector<128x128xf32>
    %23 = arith.mulf %3, %22 : vector<128x128xf32>
    %cst_11 = arith.constant dense<0.000000e+00> : vector<128xf32>
    %24 = vector.multi_reduction <add>, %23, %cst_11 [1] : vector<128x128xf32> to vector<128xf32>
    %25 = vector.broadcast %0 : f32 to vector<128xf32>
    %26 = arith.addf %24, %25 : vector<128xf32>
    %c1 = arith.constant 1 : index
    %c0_12 = arith.constant 0 : index
    %27 = vector.load %arg6[%c1, %c0_12] : memref<2x128xf32, #tpu.memory_space<vmem>>, vector<1x128xf32>
    %28 = vector.shape_cast %27 : vector<1x128xf32> to vector<128xf32>
    %29 = vector.shape_cast %26 : vector<128xf32> to vector<1x128xf32>
    tpu.vector_store %arg6[%c1, %c0_12], %29 {strides = array<i32>} : memref<2x128xf32, #tpu.memory_space<vmem>>, vector<1x128xf32>,
    return
  }
  func.func @transform_0(%arg0: i32) -> (i32, i32) {
    %c0_i32 = arith.constant 0 : i32
    %c0_i32_0 = arith.constant 0 : i32
    return %arg0, %c0_i32 : i32, i32
  }
  func.func @transform_1(%arg0: i32) -> (i32, i32) {
    %c0_i32 = arith.constant 0 : i32
    %c0_i32_0 = arith.constant 0 : i32
    return %arg0, %c0_i32 : i32, i32
  }
  func.func @transform_2(%arg0: i32) -> (i32, i32) {
    %c16_i32 = arith.constant 16 : i32
    %0 = arith.muli %arg0, %c16_i32 : i32
    %c16_i32_0 = arith.constant 16 : i32
    %1 = arith.addi %0, %c16_i32_0 : i32
    %c1_i32 = arith.constant 1 : i32
    %2 = arith.subi %1, %c1_i32 : i32
    %c16_i32_1 = arith.constant 16 : i32
    %c0_i32 = arith.constant 0 : i32
    %3 = arith.cmpi eq, %c16_i32_1, %c0_i32 : i32
    %c1_i32_2 = arith.constant 1 : i32
    %4 = arith.select %3, %c1_i32_2, %c16_i32_1 : i32
    %5 = arith.remsi %2, %4 : i32
    %c0_i32_3 = arith.constant 0 : i32
    %6 = arith.cmpi ne, %5, %c0_i32_3 : i32
    %c0_i32_4 = arith.constant 0 : i32
    %7 = arith.cmpi slt, %5, %c0_i32_4 : i32
    %c0_i32_5 = arith.constant 0 : i32
    %8 = arith.cmpi slt, %4, %c0_i32_5 : i32
    %9 = arith.xori %7, %8 : i1
    %10 = arith.andi %9, %6 : i1
    %11 = arith.addi %5, %4 : i32
    %12 = arith.select %10, %11, %5 : i32
    %c0_i32_6 = arith.constant 0 : i32
    %c0_i32_7 = arith.constant 0 : i32
    return %12, %c0_i32_6 : i32, i32
  }
  func.func @transform_3(%arg0: i32) -> (i32, i32) {
    %c0_i32 = arith.constant 0 : i32
    %c0_i32_0 = arith.constant 0 : i32
    %c0_i32_1 = arith.constant 0 : i32
    return %c0_i32, %c0_i32_0 : i32, i32
  }
  func.func @transform_4(%arg0: i32) -> i32 {
    %c0_i32 = arith.constant 0 : i32
    %c0_i32_0 = arith.constant 0 : i32
    return %c0_i32 : i32
  }
  func.func @transform_5(%arg0: i32) -> (i32, i32) {
    %c0_i32 = arith.constant 0 : i32
    %c0_i32_0 = arith.constant 0 : i32
    return %c0_i32, %arg0 : i32, i32
  }
}

</mosaic_0001>

<llo_original>
// kernel: tpu_custom_call.1
$region0: #{tpu_custom_call.1}
  #allocation0 [shape = 'u32[]', space=smem, size = 0x4, offset = 0x4, fixed_abs, tag = 'smem constant byte address 0x4 - core index']
  #allocation1 [shape = 'u32[144,128]{1,0:T(1,128)}', space=vmem, size = 0x12000, scoped, tag = 'internal scratch']
  #allocation2 [shape = 'f32[1]{0:T(128)S(6)}', space=smem, size = 0x200, scoped, tag = 'scoped memory for tpu_custom_call.1']
  %s0 = inlined_call_operand.hbm [shape: bf16[128,128], index: 0, kind: input, shape index: {}]
  %s1 = inlined_call_operand.hbm [shape: bf16[128,128], index: 1, kind: input, shape index: {}]
  %s2 = inlined_call_operand.hbm [shape: bf16[128,128], index: 2, kind: input, shape index: {}]
  %s3 = inlined_call_operand.hbm [shape: bf16[128,128], index: 3, kind: input, shape index: {}]
  %s4 = inlined_call_operand.<no memory space> [shape: f32[1], index: 4, kind: input, shape index: {}]
  %s5 = inlined_call_operand.hbm [shape: f32[2,128], index: 5, kind: output, shape index: {}]
  %s6 = sld [smem:[#allocation0]]
  $region46: #{tpu_custom_call.1} parent=0
    _
  %s8 = ssub.s32 1, %s6
  %s9 = scalar_select 0, %s8, %s6
  %10 = sst [smem:[#allocation2]] %s4
  $region1: #{tpu_custom_call.1} parent=0
    #allocation3 [shape = 'u8[32768]{0}', space=vmem, size = 0x8000, scoped, tag = 'input window, operand 0, single buffered']
    #allocation4 [shape = 's32[1]{0}', space=sflag, size = 0x4, scoped, tag = 'scoped memory for tpu_custom_call.1']
    #allocation5 [shape = 's32[1]{0}', space=sflag, size = 0x4, scoped, tag = 'scoped memory for tpu_custom_call.1']
    #allocation6 [shape = 'u8[32768]{0}', space=vmem, size = 0x8000, scoped, tag = 'input window, operand 1, single buffered']
    #allocation7 [shape = 's32[1]{0}', space=sflag, size = 0x4, scoped, tag = 'scoped memory for tpu_custom_call.1']
    #allocation8 [shape = 'u8[2048]{0}', space=vmem, size = 0x800, scoped, tag = 'input window, operand 2, single buffered']
    #allocation9 [shape = 'u8[32768]{0}', space=vmem, size = 0x8000, scoped, tag = 'input window, operand 3, single buffered']
    #allocation10 [shape = 's32[1]{0}', space=sflag, size = 0x4, scoped, tag = 'scoped memory for tpu_custom_call.1']
    #allocation11 [shape = 'u8[1024]{0}', space=vmem, size = 0x400, scoped, tag = 'output window, operand 0, single buffered']
    %11 = vsyncpa [#allocation4], 0
    %12 = vsyncpa [#allocation7], 0
    %13 = vsyncpa [#allocation10], 0
    %14 = vsyncpa [#allocation5], 0
    // Predicated region
    $region2: #{tpu_custom_call.1} parent=1 // pred_check
      _
    $region3: #{tpu_custom_call.1} parent=1 // pred_check_branch
      %16 = sbr.rel (0) target = $region5
    $region4: #{tpu_custom_call.1} parent=1 // pred_region
      %s18 = ssub.s32 1024, 1024
      %19 = vsyncadd [#allocation4], %s18
      %s20 = sshll.u32 [#allocation3], 4
      %s21 = int_to_ptr.vmem [resolvable:$true] %s20
      %26 = dma.hbm_to_vmem [thread:$0]  %s0, 1024, %s21, [#allocation4], 64, 64, 4
    $region5: #{tpu_custom_call.1} parent=1 // pred_fallthru
      _
    // Predicated region
    $region6: #{tpu_custom_call.1} parent=1 // pred_check
      _
    $region7: #{tpu_custom_call.1} parent=1 // pred_check_branch
      %28 = sbr.rel (0) target = $region9
    $region8: #{tpu_custom_call.1} parent=1 // pred_region
      %s30 = ssub.s32 1024, 1024
      %31 = vsyncadd [#allocation7], %s30
      %s32 = sshll.u32 [#allocation6], 4
      %s33 = int_to_ptr.vmem [resolvable:$true] %s32
      %38 = dma.hbm_to_vmem [thread:$0]  %s1, 1024, %s33, [#allocation7], 64, 64, 4
    $region9: #{tpu_custom_call.1} parent=1 // pred_fallthru
      _
    // Predicated region
    $region10: #{tpu_custom_call.1} parent=1 // pred_check
      _
    $region11: #{tpu_custom_call.1} parent=1 // pred_check_branch
      %40 = sbr.rel (0) target = $region13
    $region12: #{tpu_custom_call.1} parent=1 // pred_region
      %s41 = smul.u32 0, 16
      %s42 = sadd.s32 %s41, 15
      %p43 = scmp.lt.s32.totalorder %s42, 0
      %s44 = ssub.s32 0, %s42
      %s45 = scalar_select %p43, %s44, %s42
      %s46 = sand.u32 %s45, 15
      %s47 = ssub.s32 0, %s46
      %s48 = scalar_select %p43, %s47, %s46
      %p49 = scmp.ne.s32.totalorder %s48, 0
      %p50 = scmp.lt.s32.totalorder %s48, 0
      %p51 = pnand %p50, %p49
      %p52 = pneg %p51
      %s53 = sadd.s32 %s48, 16
      %s54 = scalar_select %p52, %s53, %s48
      %s56 = ssub.s32 64, 64
      %57 = vsyncadd [#allocation7], %s56
      %s58 = smul.addr %s54, 64
      %s59 = scalar_lea.hbm %s2, %s58
      %s61 = sshll.u32 [#allocation8], 4
      %s62 = int_to_ptr.vmem [resolvable:$true] %s61
      %64 = dma.hbm_to_vmem [thread:$0]  %s59, 64, %s62, [#allocation7]
    $region13: #{tpu_custom_call.1} parent=1 // pred_fallthru
      _
    // Predicated region
    $region14: #{tpu_custom_call.1} parent=1 // pred_check
      _
    $region15: #{tpu_custom_call.1} parent=1 // pred_check_branch
      %66 = sbr.rel (0) target = $region17
    $region16: #{tpu_custom_call.1} parent=1 // pred_region
      %s68 = ssub.s32 1024, 1024
      %69 = vsyncadd [#allocation10], %s68
      %s70 = sshll.u32 [#allocation9], 4
      %s71 = int_to_ptr.vmem [resolvable:$true] %s70
      %76 = dma.hbm_to_vmem [thread:$0]  %s3, 1024, %s71, [#allocation10], 64, 64, 4
    $region17: #{tpu_custom_call.1} parent=1 // pred_fallthru
      _
    // Predicated region
    $region18: #{tpu_custom_call.1} parent=1 // pred_check
      _
    $region19: #{tpu_custom_call.1} parent=1 // pred_check_branch
      %78 = sbr.rel (0) target = $region21
    $region20: #{tpu_custom_call.1} parent=1 // pred_region
      _
    $region21: #{tpu_custom_call.1} parent=1 // pred_fallthru
      _
    // Predicated region
    $region22: #{tpu_custom_call.1} parent=1 // pred_check
      _
    $region23: #{tpu_custom_call.1} parent=1 // pred_check_branch
      %80 = sbr.rel (0) target = $region25
    $region24: #{tpu_custom_call.1} parent=1 // pred_region
      %81 = dma.done [#allocation4], 1024
    $region25: #{tpu_custom_call.1} parent=1 // pred_fallthru
      _
    // Predicated region
    $region26: #{tpu_custom_call.1} parent=1 // pred_check
      _
    $region27: #{tpu_custom_call.1} parent=1 // pred_check_branch
      %83 = sbr.rel (0) target = $region29
    $region28: #{tpu_custom_call.1} parent=1 // pred_region
      %84 = dma.done [#allocation7], 1024
    $region29: #{tpu_custom_call.1} parent=1 // pred_fallthru
      _
    // Predicated region
    $region30: #{tpu_custom_call.1} parent=1 // pred_check
      _
    $region31: #{tpu_custom_call.1} parent=1 // pred_check_branch
      %86 = sbr.rel (0) target = $region33
    $region32: #{tpu_custom_call.1} parent=1 // pred_region
      %87 = dma.done [#allocation7], 64
    $region33: #{tpu_custom_call.1} parent=1 // pred_fallthru
      _
    // Predicated region
    $region34: #{tpu_custom_call.1} parent=1 // pred_check
      _
    $region35: #{tpu_custom_call.1} parent=1 // pred_check_branch
      %89 = sbr.rel (0) target = $region37
    $region36: #{tpu_custom_call.1} parent=1 // pred_region
      %90 = dma.done [#allocation10], 1024
    $region37: #{tpu_custom_call.1} parent=1 // pred_fallthru
      _
    %s91 = smul.u32 0, 16
    %s92 = sadd.s32 %s91, 15
    %p93 = scmp.lt.s32.totalorder %s92, 0
    %s94 = ssub.s32 0, %s92
    %s95 = scalar_select %p93, %s94, %s92
    %s96 = sand.u32 %s95, 15
    %s97 = ssub.s32 0, %s96
    %s98 = scalar_select %p93, %s97, %s96
    %p99 = scmp.ne.s32.totalorder %s98, 0
    %p100 = scmp.lt.s32.totalorder %s98, 0
    %p101 = pnand %p100, %p99
    %p102 = pneg %p101
    %s103 = sadd.s32 %s98, 16
    %s104 = scalar_select %p102, %s103, %s98
    %s106 = sld [smem:[#allocation2]]
    %v107 = vld [vmem:[#allocation3] sm:$0xf]
    %v108 = vld [vmem:[#allocation3 + $0x4] sm:$0xf]
    %v109 = vld [vmem:[#allocation3 + $0x8] sm:$0xf]
    %v110 = vld [vmem:[#allocation3 + $0xc] sm:$0xf]
    %v111 = vld [vmem:[#allocation3 + $0x10] sm:$0xf]
    %v112 = vld [vmem:[#allocation3 + $0x14] sm:$0xf]
    %v113 = vld [vmem:[#allocation3 + $0x18] sm:$0xf]
    %v114 = vld [vmem:[#allocation3 + $0x1c] sm:$0xf]
    %v115 = vld [vmem:[#allocation3 + $0x20] sm:$0xf]
    %v116 = vld [vmem:[#allocation3 + $0x24] sm:$0xf]
    %v117 = vld [vmem:[#allocation3 + $0x28] sm:$0xf]
    %v118 = vld [vmem:[#allocation3 + $0x2c] sm:$0xf]
    %v119 = vld [vmem:[#allocation3 + $0x30] sm:$0xf]
    %v120 = vld [vmem:[#allocation3 + $0x34] sm:$0xf]
    %v121 = vld [vmem:[#allocation3 + $0x38] sm:$0xf]
    %v122 = vld [vmem:[#allocation3 + $0x3c] sm:$0xf]
    %v123 = vld [vmem:[#allocation9] sm:$0xf]
    %v124 = vld [vmem:[#allocation9 + $0x4] sm:$0xf]
    %v125 = vld [vmem:[#allocation9 + $0x8] sm:$0xf]
    %v126 = vld [vmem:[#allocation9 + $0xc] sm:$0xf]
    %v127 = vld [vmem:[#allocation9 + $0x10] sm:$0xf]
    %v128 = vld [vmem:[#allocation9 + $0x14] sm:$0xf]
    %v129 = vld [vmem:[#allocation9 + $0x18] sm:$0xf]
    %v130 = vld [vmem:[#allocation9 + $0x1c] sm:$0xf]
    %v131 = vld [vmem:[#allocation9 + $0x20] sm:$0xf]
    %v132 = vld [vmem:[#allocation9 + $0x24] sm:$0xf]
    %v133 = vld [vmem:[#allocation9 + $0x28] sm:$0xf]
    %v134 = vld [vmem:[#allocation9 + $0x2c] sm:$0xf]
    %v135 = vld [vmem:[#allocation9 + $0x30] sm:$0xf]
    %v136 = vld [vmem:[#allocation9 + $0x34] sm:$0xf]
    %v137 = vld [vmem:[#allocation9 + $0x38] sm:$0xf]
    %v138 = vld [vmem:[#allocation9 + $0x3c] sm:$0xf]
    %v155 = vunpack.c.l.b16 %v107
    %v156 = vunpack.c.l.b16 %v108
    %v157 = vunpack.c.l.b16 %v109
    %v158 = vunpack.c.l.b16 %v110
    %v159 = vunpack.c.l.b16 %v111
    %v160 = vunpack.c.l.b16 %v112
    %v161 = vunpack.c.l.b16 %v113
    %v162 = vunpack.c.l.b16 %v114
    %v163 = vunpack.c.l.b16 %v115
    %v164 = vunpack.c.l.b16 %v116
    %v165 = vunpack.c.l.b16 %v117
    %v166 = vunpack.c.l.b16 %v118
    %v167 = vunpack.c.l.b16 %v119
    %v168 = vunpack.c.l.b16 %v120
    %v169 = vunpack.c.l.b16 %v121
    %v170 = vunpack.c.l.b16 %v122
    %v171 = vpack.c.b16 %v156, %v155
    %v172 = vpack.c.b16 %v158, %v157
    %v173 = vpack.c.b16 %v160, %v159
    %v174 = vpack.c.b16 %v162, %v161
    %v175 = vpack.c.b16 %v164, %v163
    %v176 = vpack.c.b16 %v166, %v165
    %v177 = vpack.c.b16 %v168, %v167
    %v178 = vpack.c.b16 %v170, %v169
    %v203 = vunpack.c.l.b16 %v123
    %v204 = vunpack.c.l.b16 %v124
    %v205 = vunpack.c.l.b16 %v125
    %v206 = vunpack.c.l.b16 %v126
    %v207 = vunpack.c.l.b16 %v127
    %v208 = vunpack.c.l.b16 %v128
    %v209 = vunpack.c.l.b16 %v129
    %v210 = vunpack.c.l.b16 %v130
    %v211 = vunpack.c.l.b16 %v131
    %v212 = vunpack.c.l.b16 %v132
    %v213 = vunpack.c.l.b16 %v133
    %v214 = vunpack.c.l.b16 %v134
    %v215 = vunpack.c.l.b16 %v135
    %v216 = vunpack.c.l.b16 %v136
    %v217 = vunpack.c.l.b16 %v137
    %v218 = vunpack.c.l.b16 %v138
    %v219 = vpack.c.b16 %v204, %v203
    %v220 = vpack.c.b16 %v206, %v205
    %v221 = vpack.c.b16 %v208, %v207
    %v222 = vpack.c.b16 %v210, %v209
    %v223 = vpack.c.b16 %v212, %v211
    %v224 = vpack.c.b16 %v214, %v213
    %v225 = vpack.c.b16 %v216, %v215
    %v226 = vpack.c.b16 %v218, %v217
    %235 = vmatprep.subr.bf16.mxu0 0
    %236 = vmatpush1.bf16.msra.mxu0 %v226
    %237 = vmatprep.subr.bf16.mxu0 0
    %238 = vmatpush1.bf16.msra.mxu0 %v225
    %239 = vmatprep.subr.bf16.mxu0 0
    %240 = vmatpush1.bf16.msra.mxu0 %v224
    %241 = vmatprep.subr.bf16.mxu0 0
    %242 = vmatpush1.bf16.msra.mxu0 %v223
    %243 = vmatprep.subr.bf16.mxu0 0
    %244 = vmatpush1.bf16.msra.mxu0 %v222
    %245 = vmatprep.subr.bf16.mxu0 0
    %246 = vmatpush1.bf16.msra.mxu0 %v221
    %247 = vmatprep.subr.bf16.mxu0 0
    %248 = vmatpush1.bf16.msra.mxu0 %v220
    %249 = vmatprep.subr.bf16.mxu0 0
    %250 = vmatpush1.bf16.msra.mxu0 %v219
    %251 = vmatprep.subr.bf16.mxu0 0
    %252 = vmatpush2.bf16.msra.mxu0 0
    %253 = vmatprep.subr.bf16.mxu0 0
    %254 = vmatpush2.bf16.msra.mxu0 0
    %255 = vmatprep.subr.bf16.mxu0 0
    %256 = vmatpush2.bf16.msra.mxu0 0
    %257 = vmatprep.subr.bf16.mxu0 0
    %258 = vmatpush2.bf16.msra.mxu0 0
    %259 = vmatprep.subr.bf16.mxu0 0
    %260 = vmatpush2.bf16.msra.mxu0 0
    %261 = vmatprep.subr.bf16.mxu0 0
    %262 = vmatpush2.bf16.msra.mxu0 0
    %263 = vmatprep.subr.bf16.mxu0 0
    %264 = vmatpush2.bf16.msra.mxu0 0
    %265 = vmatprep.subr.bf16.mxu0 0
    %266 = vmatpush2.bf16.msra.mxu0 0
    %267 = vmatprep.mubr.bf16.mxu0 0
    %268 = vmatmul.mubr.bf16.gmra.mxu0 %v171
    %v269 = vpop.f32.mrf.mxu0
    %v270 = vadd.f32 0.0, %v269
    %v271 = vpop.f32.mrf.mxu0
    %v272 = vpop.f32.mrf.mxu0
    %v273 = vadd.f32 0.0, %v272
    %v274 = vpop.f32.mrf.mxu0
    %275 = vmatprep.mubr.bf16.mxu0 0
    %276 = vmatmul.mubr.bf16.gmra.mxu0 %v172
    %v277 = vpop.f32.mrf.mxu0
    %v278 = vadd.f32 0.0, %v277
    %v279 = vpop.f32.mrf.mxu0
    %v280 = vpop.f32.mrf.mxu0
    %v281 = vadd.f32 0.0, %v280
    %v282 = vpop.f32.mrf.mxu0
    %283 = vmatprep.mubr.bf16.mxu0 0
    %284 = vmatmul.mubr.bf16.gmra.mxu0 %v173
    %v285 = vpop.f32.mrf.mxu0
    %v286 = vadd.f32 0.0, %v285
    %v287 = vpop.f32.mrf.mxu0
    %v288 = vpop.f32.mrf.mxu0
    %v289 = vadd.f32 0.0, %v288
    %v290 = vpop.f32.mrf.mxu0
    %291 = vmatprep.mubr.bf16.mxu0 0
    %292 = vmatmul.mubr.bf16.gmra.mxu0 %v174
    %v293 = vpop.f32.mrf.mxu0
    %v294 = vadd.f32 0.0, %v293
    %v295 = vpop.f32.mrf.mxu0
    %v296 = vpop.f32.mrf.mxu0
    %v297 = vadd.f32 0.0, %v296
    %v298 = vpop.f32.mrf.mxu0
    %299 = vmatprep.mubr.bf16.mxu0 0
    %300 = vmatmul.mubr.bf16.gmra.mxu0 %v175
    %v301 = vpop.f32.mrf.mxu0
    %v302 = vadd.f32 0.0, %v301
    %v303 = vpop.f32.mrf.mxu0
    %v304 = vpop.f32.mrf.mxu0
    %v305 = vadd.f32 0.0, %v304
    %v306 = vpop.f32.mrf.mxu0
    %307 = vmatprep.mubr.bf16.mxu0 0
    %308 = vmatmul.mubr.bf16.gmra.mxu0 %v176
    %v309 = vpop.f32.mrf.mxu0
    %v310 = vadd.f32 0.0, %v309
    %v311 = vpop.f32.mrf.mxu0
    %v312 = vpop.f32.mrf.mxu0
    %v313 = vadd.f32 0.0, %v312
    %v314 = vpop.f32.mrf.mxu0
    %315 = vmatprep.mubr.bf16.mxu0 0
    %316 = vmatmul.mubr.bf16.gmra.mxu0 %v177
    %v317 = vpop.f32.mrf.mxu0
    %v318 = vadd.f32 0.0, %v317
    %v319 = vpop.f32.mrf.mxu0
    %v320 = vpop.f32.mrf.mxu0
    %v321 = vadd.f32 0.0, %v320
    %v322 = vpop.f32.mrf.mxu0
    %323 = vmatprep.mubr.bf16.mxu0 0
    %324 = vmatmul.mubr.bf16.gmra.mxu0 %v178
    %v325 = vpop.f32.mrf.mxu0
    %v326 = vadd.f32 0.0, %v325
    %v327 = vpop.f32.mrf.mxu0
    %v328 = vpop.f32.mrf.mxu0
    %v329 = vadd.f32 0.0, %v328
    %v330 = vpop.f32.mrf.mxu0
    %331 = vdwg.mxu0
    %v332 = vld [vmem:[#allocation6] sm:$0xf]
    %v333 = vld [vmem:[#allocation6 + $0x4] sm:$0xf]
    %v334 = vld [vmem:[#allocation6 + $0x8] sm:$0xf]
    %v335 = vld [vmem:[#allocation6 + $0xc] sm:$0xf]
    %v336 = vld [vmem:[#allocation6 + $0x10] sm:$0xf]
    %v337 = vld [vmem:[#allocation6 + $0x14] sm:$0xf]
    %v338 = vld [vmem:[#allocation6 + $0x18] sm:$0xf]
    %v339 = vld [vmem:[#allocation6 + $0x1c] sm:$0xf]
    %v340 = vld [vmem:[#allocation6 + $0x20] sm:$0xf]
    %v341 = vld [vmem:[#allocation6 + $0x24] sm:$0xf]
    %v342 = vld [vmem:[#allocation6 + $0x28] sm:$0xf]
    %v343 = vld [vmem:[#allocation6 + $0x2c] sm:$0xf]
    %v344 = vld [vmem:[#allocation6 + $0x30] sm:$0xf]
    %v345 = vld [vmem:[#allocation6 + $0x34] sm:$0xf]
    %v346 = vld [vmem:[#allocation6 + $0x38] sm:$0xf]
    %v347 = vld [vmem:[#allocation6 + $0x3c] sm:$0xf]
    %v348 = vunpack.c.l.bf16 %v332
    %v349 = vunpack.c.l.bf16 %v333
    %v350 = vunpack.c.l.bf16 %v334
    %v351 = vunpack.c.l.bf16 %v335
    %v352 = vunpack.c.l.bf16 %v336
    %v353 = vunpack.c.l.bf16 %v337
    %v354 = vunpack.c.l.bf16 %v338
    %v355 = vunpack.c.l.bf16 %v339
    %v356 = vunpack.c.l.bf16 %v340
    %v357 = vunpack.c.l.bf16 %v341
    %v358 = vunpack.c.l.bf16 %v342
    %v359 = vunpack.c.l.bf16 %v343
    %v360 = vunpack.c.l.bf16 %v344
    %v361 = vunpack.c.l.bf16 %v345
    %v362 = vunpack.c.l.bf16 %v346
    %v363 = vunpack.c.l.bf16 %v347
    %v364 = vmul.f32 %v270, %v348
    %v365 = vmul.f32 %v273, %v349
    %v366 = vmul.f32 %v278, %v350
    %v367 = vmul.f32 %v281, %v351
    %v368 = vmul.f32 %v286, %v352
    %v369 = vmul.f32 %v289, %v353
    %v370 = vmul.f32 %v294, %v354
    %v371 = vmul.f32 %v297, %v355
    %v372 = vmul.f32 %v302, %v356
    %v373 = vmul.f32 %v305, %v357
    %v374 = vmul.f32 %v310, %v358
    %v375 = vmul.f32 %v313, %v359
    %v376 = vmul.f32 %v318, %v360
    %v377 = vmul.f32 %v321, %v361
    %v378 = vmul.f32 %v326, %v362
    %v379 = vmul.f32 %v329, %v363
    %380 = vadd.xlane.f32.xlu0 %v364
    %v381 = vpop.xlane.xlu0 %380
    %382 = vadd.xlane.f32.xlu0 %v365
    %v383 = vpop.xlane.xlu0 %382
    %384 = vadd.xlane.f32.xlu0 %v366
    %v385 = vpop.xlane.xlu0 %384
    %386 = vadd.xlane.f32.xlu0 %v367
    %v387 = vpop.xlane.xlu0 %386
    %388 = vadd.xlane.f32.xlu0 %v368
    %v389 = vpop.xlane.xlu0 %388
    %390 = vadd.xlane.f32.xlu0 %v369
    %v391 = vpop.xlane.xlu0 %390
    %392 = vadd.xlane.f32.xlu0 %v370
    %v393 = vpop.xlane.xlu0 %392
    %394 = vadd.xlane.f32.xlu0 %v371
    %v395 = vpop.xlane.xlu0 %394
    %396 = vadd.xlane.f32.xlu0 %v372
    %v397 = vpop.xlane.xlu0 %396
    %398 = vadd.xlane.f32.xlu0 %v373
    %v399 = vpop.xlane.xlu0 %398
    %400 = vadd.xlane.f32.xlu0 %v374
    %v401 = vpop.xlane.xlu0 %400
    %402 = vadd.xlane.f32.xlu0 %v375
    %v403 = vpop.xlane.xlu0 %402
    %404 = vadd.xlane.f32.xlu0 %v376
    %v405 = vpop.xlane.xlu0 %404
    %406 = vadd.xlane.f32.xlu0 %v377
    %v407 = vpop.xlane.xlu0 %406
    %408 = vadd.xlane.f32.xlu0 %v378
    %v409 = vpop.xlane.xlu0 %408
    %410 = vadd.xlane.f32.xlu0 %v379
    %v411 = vpop.xlane.xlu0 %410
    %v412 = vstv %s106
    %v413 = vadd.f32 %v381, %v412
    %v414 = vadd.f32 %v383, %v412
    %v415 = vadd.f32 %v385, %v412
    %v416 = vadd.f32 %v387, %v412
    %v417 = vadd.f32 %v389, %v412
    %v418 = vadd.f32 %v391, %v412
    %v419 = vadd.f32 %v393, %v412
    %v420 = vadd.f32 %v395, %v412
    %v421 = vadd.f32 %v397, %v412
    %v422 = vadd.f32 %v399, %v412
    %v423 = vadd.f32 %v401, %v412
    %v424 = vadd.f32 %v403, %v412
    %v425 = vadd.f32 %v405, %v412
    %v426 = vadd.f32 %v407, %v412
    %v427 = vadd.f32 %v409, %v412
    %v428 = vadd.f32 %v411, %v412
    %v445 = vlaneseq
    %v446 = vand.u32 %v445, 127
    %v447 = vlaneseq
    %v448 = vshrl.u32 %v447, 7
    %v449 = vsub.s32 %v446, %v448
    %v450 = vrot.slane %v413, %v449
    %v451 = vadd.s32 %v446, 4294967288
    %v452 = vlaneseq
    %v453 = vshrl.u32 %v452, 7
    %v454 = vsub.s32 %v451, %v453
    %v455 = vrot.slane %v414, %v454
    %vm456 = vcmask 130112
    %v457 = vsel %vm456, %v455, %v450
    %v458 = vadd.s32 %v446, 4294967280
    %v459 = vlaneseq
    %v460 = vshrl.u32 %v459, 7
    %v461 = vsub.s32 %v458, %v460
    %v462 = vrot.slane %v415, %v461
    %vm463 = vcmask 195712
    %v464 = vsel %vm463, %v462, %v457
    %v465 = vadd.s32 %v446, 4294967272
    %v466 = vlaneseq
    %v467 = vshrl.u32 %v466, 7
    %v468 = vsub.s32 %v465, %v467
    %v469 = vrot.slane %v416, %v468
    %vm470 = vcmask 261312
    %v471 = vsel %vm470, %v469, %v464
    %v472 = vadd.s32 %v446, 4294967264
    %v473 = vlaneseq
    %v474 = vshrl.u32 %v473, 7
    %v475 = vsub.s32 %v472, %v474
    %v476 = vrot.slane %v417, %v475
    %vm477 = vcmask 326912
    %v478 = vsel %vm477, %v476, %v471
    %v479 = vadd.s32 %v446, 4294967256
    %v480 = vlaneseq
    %v481 = vshrl.u32 %v480, 7
    %v482 = vsub.s32 %v479, %v481
    %v483 = vrot.slane %v418, %v482
    %vm484 = vcmask 392512
    %v485 = vsel %vm484, %v483, %v478
    %v486 = vadd.s32 %v446, 4294967248
    %v487 = vlaneseq
    %v488 = vshrl.u32 %v487, 7
    %v489 = vsub.s32 %v486, %v488
    %v490 = vrot.slane %v419, %v489
    %vm491 = vcmask 458112
    %v492 = vsel %vm491, %v490, %v485
    %v493 = vadd.s32 %v446, 4294967240
    %v494 = vlaneseq
    %v495 = vshrl.u32 %v494, 7
    %v496 = vsub.s32 %v493, %v495
    %v497 = vrot.slane %v420, %v496
    %vm498 = vcmask 523712
    %v499 = vsel %vm498, %v497, %v492
    %v500 = vadd.s32 %v446, 4294967232
    %v501 = vlaneseq
    %v502 = vshrl.u32 %v501, 7
    %v503 = vsub.s32 %v500, %v502
    %v504 = vrot.slane %v421, %v503
    %vm505 = vcmask 589312
    %v506 = vsel %vm505, %v504, %v499
    %v507 = vadd.s32 %v446, 4294967224
    %v508 = vlaneseq
    %v509 = vshrl.u32 %v508, 7
    %v510 = vsub.s32 %v507, %v509
    %v511 = vrot.slane %v422, %v510
    %vm512 = vcmask 654912
    %v513 = vsel %vm512, %v511, %v506
    %v514 = vadd.s32 %v446, 4294967216
    %v515 = vlaneseq
    %v516 = vshrl.u32 %v515, 7
    %v517 = vsub.s32 %v514, %v516
    %v518 = vrot.slane %v423, %v517
    %vm519 = vcmask 720512
    %v520 = vsel %vm519, %v518, %v513
    %v521 = vadd.s32 %v446, 4294967208
    %v522 = vlaneseq
    %v523 = vshrl.u32 %v522, 7
    %v524 = vsub.s32 %v521, %v523
    %v525 = vrot.slane %v424, %v524
    %vm526 = vcmask 786112
    %v527 = vsel %vm526, %v525, %v520
    %v528 = vadd.s32 %v446, 4294967200
    %v529 = vlaneseq
    %v530 = vshrl.u32 %v529, 7
    %v531 = vsub.s32 %v528, %v530
    %v532 = vrot.slane %v425, %v531
    %vm533 = vcmask 851712
    %v534 = vsel %vm533, %v532, %v527
    %v535 = vadd.s32 %v446, 4294967192
    %v536 = vlaneseq
    %v537 = vshrl.u32 %v536, 7
    %v538 = vsub.s32 %v535, %v537
    %v539 = vrot.slane %v426, %v538
    %vm540 = vcmask 917312
    %v541 = vsel %vm540, %v539, %v534
    %v542 = vadd.s32 %v446, 4294967184
    %v543 = vlaneseq
    %v544 = vshrl.u32 %v543, 7
    %v545 = vsub.s32 %v542, %v544
    %v546 = vrot.slane %v427, %v545
    %vm547 = vcmask 982912
    %v548 = vsel %vm547, %v546, %v541
    %v549 = vadd.s32 %v446, 4294967176
    %v550 = vlaneseq
    %v551 = vshrl.u32 %v550, 7
    %v552 = vsub.s32 %v549, %v551
    %v553 = vrot.slane %v428, %v552
    %vm554 = vcmask 1048512
    %v555 = vsel %vm554, %v553, %v548
    %557 = vst [vmem:[#allocation11] sm:$0x1] %v555
    %v558 = vlaneseq
    %v559 = vshrl.u32 %v558, 7
    %v560 = vadd.s32 %v559, 8
    %v561 = vadd.s32 %v559, 16
    %v562 = vadd.s32 %v559, 24
    %v563 = vadd.s32 %v559, 32
    %v564 = vadd.s32 %v559, 40
    %v565 = vadd.s32 %v559, 48
    %v566 = vadd.s32 %v559, 56
    %v567 = vadd.s32 %v559, 64
    %v568 = vadd.s32 %v559, 72
    %v569 = vadd.s32 %v559, 80
    %v570 = vadd.s32 %v559, 88
    %v571 = vadd.s32 %v559, 96
    %v572 = vadd.s32 %v559, 104
    %v573 = vadd.s32 %v559, 112
    %v574 = vadd.s32 %v559, 120
    %v575 = vld [vmem:[#allocation8] sm:$0xf]
    %v576 = vunpack.c.l.bf16 %v575
    %v577 = vrot.slane %v348, 7
    %v578 = vrot.slane %v349, 7
    %v579 = vrot.slane %v350, 7
    %v580 = vrot.slane %v351, 7
    %v581 = vrot.slane %v352, 7
    %v582 = vrot.slane %v353, 7
    %v583 = vrot.slane %v354, 7
    %v584 = vrot.slane %v355, 7
    %v585 = vrot.slane %v356, 7
    %v586 = vrot.slane %v357, 7
    %v587 = vrot.slane %v358, 7
    %v588 = vrot.slane %v359, 7
    %v589 = vrot.slane %v360, 7
    %v590 = vrot.slane %v361, 7
    %v591 = vrot.slane %v362, 7
    %v592 = vrot.slane %v363, 7
    %vm593 = vcmp.lt.s32.totalorder %v559, 1
    %v594 = vsel %vm593, %v591, %v592
    %v595 = vsel %vm593, %v590, %v591
    %v596 = vsel %vm593, %v589, %v590
    %v597 = vsel %vm593, %v588, %v589
    %v598 = vsel %vm593, %v587, %v588
    %v599 = vsel %vm593, %v586, %v587
    %v600 = vsel %vm593, %v585, %v586
    %v601 = vsel %vm593, %v584, %v585
    %v602 = vsel %vm593, %v583, %v584
    %v603 = vsel %vm593, %v582, %v583
    %v604 = vsel %vm593, %v581, %v582
    %v605 = vsel %vm593, %v580, %v581
    %v606 = vsel %vm593, %v579, %v580
    %v607 = vsel %vm593, %v578, %v579
    %v608 = vsel %vm593, %v577, %v578
    %v609 = vsel %vm593, %v592, %v577
    %vm610 = vcmp.eq.s32.totalorder %v559, 0
    %vm611 = vcmp.eq.s32.totalorder %v560, 0
    %vm612 = vcmp.eq.s32.totalorder %v561, 0
    %vm613 = vcmp.eq.s32.totalorder %v562, 0
    %vm614 = vcmp.eq.s32.totalorder %v563, 0
    %vm615 = vcmp.eq.s32.totalorder %v564, 0
    %vm616 = vcmp.eq.s32.totalorder %v565, 0
    %vm617 = vcmp.eq.s32.totalorder %v566, 0
    %vm618 = vcmp.eq.s32.totalorder %v567, 0
    %vm619 = vcmp.eq.s32.totalorder %v568, 0
    %vm620 = vcmp.eq.s32.totalorder %v569, 0
    %vm621 = vcmp.eq.s32.totalorder %v570, 0
    %vm622 = vcmp.eq.s32.totalorder %v571, 0
    %vm623 = vcmp.eq.s32.totalorder %v572, 0
    %vm624 = vcmp.eq.s32.totalorder %v573, 0
    %vm625 = vcmp.eq.s32.totalorder %v574, 0
    %v626 = vlaneseq
    %v627 = vshrl.u32 %v626, 7
    %v628 = vsub.s32 7, %v627
    %v629 = vrot.slane %v576, %v628
    %v630 = vsel %vm610, %v629, %v609
    %v631 = vsel %vm611, %v629, %v608
    %v632 = vsel %vm612, %v629, %v607
    %v633 = vsel %vm613, %v629, %v606
    %v634 = vsel %vm614, %v629, %v605
    %v635 = vsel %vm615, %v629, %v604
    %v636 = vsel %vm616, %v629, %v603
    %v637 = vsel %vm617, %v629, %v602
    %v638 = vsel %vm618, %v629, %v601
    %v639 = vsel %vm619, %v629, %v600
    %v640 = vsel %vm620, %v629, %v599
    %v641 = vsel %vm621, %v629, %v598
    %v642 = vsel %vm622, %v629, %v597
    %v643 = vsel %vm623, %v629, %v596
    %v644 = vsel %vm624, %v629, %v595
    %v645 = vsel %vm625, %v629, %v594
    %v646 = vmul.f32 %v270, %v630
    %v647 = vmul.f32 %v273, %v631
    %v648 = vmul.f32 %v278, %v632
    %v649 = vmul.f32 %v281, %v633
    %v650 = vmul.f32 %v286, %v634
    %v651 = vmul.f32 %v289, %v635
    %v652 = vmul.f32 %v294, %v636
    %v653 = vmul.f32 %v297, %v637
    %v654 = vmul.f32 %v302, %v638
    %v655 = vmul.f32 %v305, %v639
    %v656 = vmul.f32 %v310, %v640
    %v657 = vmul.f32 %v313, %v641
    %v658 = vmul.f32 %v318, %v642
    %v659 = vmul.f32 %v321, %v643
    %v660 = vmul.f32 %v326, %v644
    %v661 = vmul.f32 %v329, %v645
    %662 = vadd.xlane.f32.xlu0 %v646
    %v663 = vpop.xlane.xlu0 %662
    %664 = vadd.xlane.f32.xlu0 %v647
    %v665 = vpop.xlane.xlu0 %664
    %666 = vadd.xlane.f32.xlu0 %v648
    %v667 = vpop.xlane.xlu0 %666
    %668 = vadd.xlane.f32.xlu0 %v649
    %v669 = vpop.xlane.xlu0 %668
    %670 = vadd.xlane.f32.xlu0 %v650
    %v671 = vpop.xlane.xlu0 %670
    %672 = vadd.xlane.f32.xlu0 %v651
    %v673 = vpop.xlane.xlu0 %672
    %674 = vadd.xlane.f32.xlu0 %v652
    %v675 = vpop.xlane.xlu0 %674
    %676 = vadd.xlane.f32.xlu0 %v653
    %v677 = vpop.xlane.xlu0 %676
    %678 = vadd.xlane.f32.xlu0 %v654
    %v679 = vpop.xlane.xlu0 %678
    %680 = vadd.xlane.f32.xlu0 %v655
    %v681 = vpop.xlane.xlu0 %680
    %682 = vadd.xlane.f32.xlu0 %v656
    %v683 = vpop.xlane.xlu0 %682
    %684 = vadd.xlane.f32.xlu0 %v657
    %v685 = vpop.xlane.xlu0 %684
    %686 = vadd.xlane.f32.xlu0 %v658
    %v687 = vpop.xlane.xlu0 %686
    %688 = vadd.xlane.f32.xlu0 %v659
    %v689 = vpop.xlane.xlu0 %688
    %690 = vadd.xlane.f32.xlu0 %v660
    %v691 = vpop.xlane.xlu0 %690
    %692 = vadd.xlane.f32.xlu0 %v661
    %v693 = vpop.xlane.xlu0 %692
    %v694 = vadd.f32 %v663, %v412
    %v695 = vadd.f32 %v665, %v412
    %v696 = vadd.f32 %v667, %v412
    %v697 = vadd.f32 %v669, %v412
    %v698 = vadd.f32 %v671, %v412
    %v699 = vadd.f32 %v673, %v412
    %v700 = vadd.f32 %v675, %v412
    %v701 = vadd.f32 %v677, %v412
    %v702 = vadd.f32 %v679, %v412
    %v703 = vadd.f32 %v681, %v412
    %v704 = vadd.f32 %v683, %v412
    %v705 = vadd.f32 %v685, %v412
    %v706 = vadd.f32 %v687, %v412
    %v707 = vadd.f32 %v689, %v412
    %v708 = vadd.f32 %v691, %v412
    %v709 = vadd.f32 %v693, %v412
    %v726 = vlaneseq
    %v727 = vshrl.u32 %v726, 7
    %v728 = vsub.s32 %v446, %v727
    %v729 = vrot.slane %v694, %v728
    %v730 = vlaneseq
    %v731 = vshrl.u32 %v730, 7
    %v732 = vsub.s32 %v451, %v731
    %v733 = vrot.slane %v695, %v732
    %v734 = vsel %vm456, %v733, %v729
    %v735 = vlaneseq
    %v736 = vshrl.u32 %v735, 7
    %v737 = vsub.s32 %v458, %v736
    %v738 = vrot.slane %v696, %v737
    %v739 = vsel %vm463, %v738, %v734
    %v740 = vlaneseq
    %v741 = vshrl.u32 %v740, 7
    %v742 = vsub.s32 %v465, %v741
    %v743 = vrot.slane %v697, %v742
    %v744 = vsel %vm470, %v743, %v739
    %v745 = vlaneseq
    %v746 = vshrl.u32 %v745, 7
    %v747 = vsub.s32 %v472, %v746
    %v748 = vrot.slane %v698, %v747
    %v749 = vsel %vm477, %v748, %v744
    %v750 = vlaneseq
    %v751 = vshrl.u32 %v750, 7
    %v752 = vsub.s32 %v479, %v751
    %v753 = vrot.slane %v699, %v752
    %v754 = vsel %vm484, %v753, %v749
    %v755 = vlaneseq
    %v756 = vshrl.u32 %v755, 7
    %v757 = vsub.s32 %v486, %v756
    %v758 = vrot.slane %v700, %v757
    %v759 = vsel %vm491, %v758, %v754
    %v760 = vlaneseq
    %v761 = vshrl.u32 %v760, 7
    %v762 = vsub.s32 %v493, %v761
    %v763 = vrot.slane %v701, %v762
    %v764 = vsel %vm498, %v763, %v759
    %v765 = vlaneseq
    %v766 = vshrl.u32 %v765, 7
    %v767 = vsub.s32 %v500, %v766
    %v768 = vrot.slane %v702, %v767
    %v769 = vsel %vm505, %v768, %v764
    %v770 = vlaneseq
    %v771 = vshrl.u32 %v770, 7
    %v772 = vsub.s32 %v507, %v771
    %v773 = vrot.slane %v703, %v772
    %v774 = vsel %vm512, %v773, %v769
    %v775 = vlaneseq
    %v776 = vshrl.u32 %v775, 7
    %v777 = vsub.s32 %v514, %v776
    %v778 = vrot.slane %v704, %v777
    %v779 = vsel %vm519, %v778, %v774
    %v780 = vlaneseq
    %v781 = vshrl.u32 %v780, 7
    %v782 = vsub.s32 %v521, %v781
    %v783 = vrot.slane %v705, %v782
    %v784 = vsel %vm526, %v783, %v779
    %v785 = vlaneseq
    %v786 = vshrl.u32 %v785, 7
    %v787 = vsub.s32 %v528, %v786
    %v788 = vrot.slane %v706, %v787
    %v789 = vsel %vm533, %v788, %v784
    %v790 = vlaneseq
    %v791 = vshrl.u32 %v790, 7
    %v792 = vsub.s32 %v535, %v791
    %v793 = vrot.slane %v707, %v792
    %v794 = vsel %vm540, %v793, %v789
    %v795 = vlaneseq
    %v796 = vshrl.u32 %v795, 7
    %v797 = vsub.s32 %v542, %v796
    %v798 = vrot.slane %v708, %v797
    %v799 = vsel %vm547, %v798, %v794
    %v800 = vlaneseq
    %v801 = vshrl.u32 %v800, 7
    %v802 = vsub.s32 %v549, %v801
    %v803 = vrot.slane %v709, %v802
    %v804 = vsel %vm554, %v803, %v799
    %806 = vst [vmem:[#allocation11 + $0x1] sm:$0x1] %v804
    // Predicated region
    $region38: #{tpu_custom_call.1} parent=1 // pred_check
      _
    $region39: #{tpu_custom_call.1} parent=1 // pred_check_branch
      %808 = sbr.rel (0) target = $region41
    $region40: #{tpu_custom_call.1} parent=1 // pred_region
      %s810 = ssub.s32 32, 32
      %811 = vsyncadd [#allocation5], %s810
      %s813 = sshll.u32 [#allocation11], 4
      %s814 = int_to_ptr.vmem [resolvable:$true] %s813
      %816 = dma.vmem_to_hbm [thread:$0]  %s814, 32, %s5, [#allocation5]
    $region41: #{tpu_custom_call.1} parent=1 // pred_fallthru
      _
    // Predicated region
    $region42: #{tpu_custom_call.1} parent=1 // pred_check
      _
    $region43: #{tpu_custom_call.1} parent=1 // pred_check_branch
      %818 = sbr.rel (0) target = $region45
    $region44: #{tpu_custom_call.1} parent=1 // pred_region
      %819 = dma.done [#allocation5], 32
    $region45: #{tpu_custom_call.1} parent=1 // pred_fallthru
      _
    %820 = vsyncpa [#allocation4], 1
    %821 = vsyncpa [#allocation7], 1
    %822 = vsyncpa [#allocation10], 1
    %823 = vsyncpa [#allocation5], 1

</llo_original>
